<compile_context>
chip_gen: v7x
topology: tpu7x:2x2x1
jax: 0.10.0
libtpu: 0.0.40
codegen_flags: <defaults>
</compile_context>

<pallas_src>
import functools

import jax
import jax.numpy as jnp
from jax.experimental import pallas as pl
from jax.experimental.pallas import tpu as pltpu


# Conv tap index k in {0..3} along one spatial axis -> (source-pixel parity, shift in the
# half-resolution grid):   padded index 2i-1+k == 2*(i+shift) + parity
_TAP = {0: (1, -1), 1: (0, 0), 2: (1, 0), 3: (0, 1)}


def _shifted_tap(plane, sh, sw, wh, not_first_col, not_last_col):
    """plane: (Cg, K) bf16 with K = hh*wh flattened as i*wh + j.
    Returns z with z[c, i*wh + j] = plane[c, (i+sh)*wh + (j+sw)], zero when out of range."""
    c, K = plane.shape
    d = sh * wh + sw  # flat lane offset of the source pixel
    if d > 0:
        z = jnp.concatenate([plane[:, d:], jnp.zeros((c, d), plane.dtype)], axis=1)
    elif d < 0:
        z = jnp.concatenate([jnp.zeros((c, -d), plane.dtype), plane[:, :K + d]], axis=1)
    else:
        z = plane
    # Rows falling off the top/bottom already fall out of the flat shift; only the column
    # (j) wrap-around needs masking.
    # TODO(synk): if this concat lowers to zeros+copy passes, switch to
    # pltpu.roll(plane, -d, axis=-1) (the wrapped lanes are covered by the same masks) to
    # move the 12 shifted taps onto the under-used XLU slot.
    if sw == 1:
        z = jnp.where(not_last_col, z, jnp.zeros_like(z))
    elif sw == -1:
        z = jnp.where(not_first_col, z, jnp.zeros_like(z))
    return z


def _downsample_kernel(x_ref, w_ref, o_ref, im2col_ref, acc_ref, *, wh, eps, neg_slope):
    # x_ref block: (1, 4, Cg, K); x_ref[0][2*ph + pw, c, i*wh + j] == x[b, g*Cg + c, 2i+ph, 2j+pw]
    g = pl.program_id(1)

    @pl.when(g == 0)
    def _init():
        acc_ref[...] = jnp.zeros_like(acc_ref)

    x = x_ref[0].astype(jnp.float32)          # (4, Cg, K); works for bf16 or f32 HBM inputs
    _, cg, K = x.shape
    n = 4.0 * K                               # = H*W elements per (batch, channel)

    # ---- InstanceNorm2d (affine=False, biased variance) — single pass: E[x], E[x^2].
    s1 = jnp.sum(jnp.sum(x, axis=0), axis=1, keepdims=True)          # (Cg, 1)
    s2 = jnp.sum(jnp.sum(x * x, axis=0), axis=1, keepdims=True)      # (Cg, 1)
    mean = s1 / n
    var = jnp.maximum(s2 / n - mean * mean, 0.0)
    y = (x - mean) * jax.lax.rsqrt(var + eps)
    # LeakyReLU(0.2), then drop to bf16 immediately: all tap shifts / masks / the im2col
    # staging run in bf16.
    y = jnp.where(y >= 0, y, neg_slope * y).astype(jnp.bfloat16)     # (4, Cg, K)

    # ---- Build the lane-dense im2col matrix directly into the bf16 VMEM scratch so at most
    # one tap is live at a time.  Row order (kh, kw, c) matches the weight column order.
    lane = jax.lax.broadcasted_iota(jnp.int32, (1, K), 1)
    col = lane % wh
    not_last_col = col < (wh - 1)             # valid when j+1 < wh
    not_first_col = col > 0                   # valid when j-1 >= 0
    for kh in range(4):
        ph, sh = _TAP[kh]
        for kw in range(4):
            pw, sw = _TAP[kw]
            t = kh * 4 + kw
            tap = _shifted_tap(y[ph * 2 + pw], sh, sw, wh, not_first_col, not_last_col)
            im2col_ref[t * cg:(t + 1) * cg, :] = tap

    # ---- Conv as one MXU matmul per channel group:
    # (C_out, 16*Cg) @ (16*Cg, K) -> (C_out, K), bf16 operands, f32 accumulate.
    acc_ref[...] += jnp.dot(w_ref[...], im2col_ref[...],
                            preferred_element_type=jnp.float32)

    @pl.when(g == pl.num_programs(1) - 1)
    def _finalize():
        o_ref[0] = acc_ref[...].astype(o_ref.dtype)


def _pick_group_size(c_pad, max_group=128):
    """Largest multiple of 8 that divides c_pad and is <= max_group."""
    cg = min(c_pad, max_group)
    cg -= cg % 8
    while cg > 8 and c_pad % cg:
        cg -= 8
    return max(cg, 8)


def downsample(x, weight, *, eps=1e-5, neg_slope=0.2, max_group=128):
    """InstanceNorm2d(affine=False) -> LeakyReLU(0.2) -> Conv2d(4, stride=2, pad=1, bias=False)."""
    B, c_in, H, W = x.shape
    c_out = weight.shape[0]
    assert weight.shape == (c_out, c_in, 4, 4)
    # TODO(synk): PyTorch Conv2d(k=4, s=2, p=1) is also defined for odd H/W; this fused kernel
    # only supports the common even-size downsampling case.
    assert H % 2 == 0 and W % 2 == 0
    hh, wh = H // 2, W // 2
    K = hh * wh

    # Pad C_in up to a multiple of 8 so every (Cg, K) parity plane is sublane aligned and the
    # MXU contraction dim (16*Cg) is a multiple of 128.  Padded channels are zero in both the
    # activation and the weight and InstanceNorm stats are per-channel, so results are exact.
    # (A multiple of 16 would additionally tile-align the bf16 im2col rows.)
    c_pad = (c_in + 7) // 8 * 8
    if c_pad != c_in:
        x = jnp.pad(x, ((0, 0), (0, c_pad - c_in), (0, 0), (0, 0)))
        weight = jnp.pad(weight, ((0, 0), (0, c_pad - c_in), (0, 0), (0, 0)))

    cg = _pick_group_size(c_pad, max_group)
    n_groups = c_pad // cg

    # glue: space-to-depth re-layout so each conv tap becomes a flat lane shift of a
    # lane-dense (Cg, hh*wh) parity plane:
    #   x_s2d[b, 2*ph + pw, c, i*wh + j] = x[b, c, 2i+ph, 2j+pw]
    # TODO(synk): for production shapes, feed NHWC (C on lanes) and do the parity split
    # in-kernel so this extra HBM read+write of the (memory-bound) input disappears; likewise
    # pack several batch samples per grid step when K < 128 to keep the output store lane-dense.
    x_s2d = (x.reshape(B, c_pad, hh, 2, wh, 2)
              .transpose(0, 3, 5, 1, 2, 4)
              .reshape(B, 4, c_pad, K))

    # bf16 lane-dense weight matrix; grouped column order (g, kh, kw, c-in-group) matches the
    # per-group im2col rows.
    w_mat = (weight.reshape(c_out, n_groups, cg, 4, 4)
                   .transpose(0, 1, 3, 4, 2)
                   .reshape(c_out, n_groups * 16 * cg)
                   .astype(jnp.bfloat16))

    kernel = functools.partial(_downsample_kernel, wh=wh, eps=eps, neg_slope=neg_slope)

    # Explicit VMEM budget: double-buffered input/weight/output blocks + im2col & accumulator
    # scratch + f32 intermediates of the tap build, with 2x headroom, capped at 64 MiB so the
    # same budget is valid on v7x (64 MiB physical) as well as v5e/v6e (128 MiB).
    in_bytes = x.dtype.itemsize
    need = (2 * 4 * cg * K * in_bytes           # input block, double buffered
            + 2 * c_out * 16 * cg * 2           # bf16 weight block, double buffered
            + 2 * c_out * K * in_bytes          # output block, double buffered
            + 16 * cg * K * 2                   # bf16 im2col scratch
            + c_out * K * 4                     # f32 accumulator scratch
            + 3 * 4 * cg * K * 4)               # f32 x / y / tap live values
    vmem_limit = int(min(max(2 * need, 32 * 2**20), 64 * 2**20))

    out_flat = pl.pallas_call(
        kernel,
        out_shape=jax.ShapeDtypeStruct((B, c_out, K), x.dtype),
        grid=(B, n_groups),
        in_specs=[
            pl.BlockSpec((1, 4, cg, K), lambda b, g: (b, 0, g, 0)),
            # NOTE: with channel-group tiling the weight block changes every step, so the
            # default double buffering overlaps the next group's weight DMA.  When
            # n_groups == 1 the block is constant and pipeline_mode=pl.Buffered(1) would
            # save one weight copy of VMEM.
            pl.BlockSpec((c_out, 16 * cg), lambda b, g: (0, g)),
        ],
        out_specs=pl.BlockSpec((1, c_out, K), lambda b, g: (b, 0, 0)),
        scratch_shapes=[
            pltpu.VMEM((16 * cg, K), jnp.bfloat16),    # im2col staging
            pltpu.VMEM((c_out, K), jnp.float32),       # conv accumulator across C_in groups
        ],
        compiler_params=pltpu.CompilerParams(
            # Batch items are independent -> shardable across v7x's two TensorCores; the
            # channel-group axis is a reduction into acc_ref, so it stays "arbitrary" and last.
            dimension_semantics=("parallel", "arbitrary"),
            vmem_limit_bytes=vmem_limit,
        ),
    )(x_s2d, w_mat)

    return out_flat.reshape(B, c_out, hh, wh)


def _reference(x, weight, eps=1e-5, neg_slope=0.2):
    mean = jnp.mean(x, axis=(2, 3), keepdims=True)
    var = jnp.mean((x - mean) ** 2, axis=(2, 3), keepdims=True)
    y = (x - mean) / jnp.sqrt(var + eps)
    y = jnp.where(y >= 0, y, neg_slope * y)
    return jax.lax.conv_general_dilated(
        y, weight, window_strides=(2, 2), padding=((1, 1), (1, 1)),
        dimension_numbers=("NCHW", "OIHW", "NCHW"),
        precision=jax.lax.Precision.HIGHEST)


if __name__ == "__main__":
    key = jax.random.PRNGKey(0)
    kx, kw = jax.random.split(key)
    B, dim_in, dim_out, H, W = 2, 4, 8, 16, 16

    x = jax.random.normal(kx, (B, dim_in, H, W), dtype=jnp.float32)
    # deterministic synthetic Conv2d weight (C_out, C_in, 4, 4), bias=False
    weight = 0.1 * jax.random.normal(kw, (dim_out, dim_in, 4, 4), dtype=jnp.float32)

    out = jax.block_until_ready(downsample(x, weight))

    ref = _reference(x, weight)
    err = float(jnp.max(jnp.abs(out - ref)))
    assert out.shape == (B, dim_out, H // 2, W // 2), out.shape
    # bf16 operands feeding the MXU (f32 accumulate) -> relaxed tolerance vs f32 reference.
    assert err < 5e-2, f"max abs error {err}"
    print("KERNEL_OK")
</pallas_src>

<mosaic_0001>
module attributes {stable_mosaic.version = 11 : i64} {
  func.func @_downsample_kernel(%arg0: i32, %arg1: i32, %arg2: memref<1x4x8x64xf32, #tpu.memory_space<vmem>>, %arg3: memref<8x128xbf16, #tpu.memory_space<vmem>>, %arg4: memref<1x8x64xf32, #tpu.memory_space<vmem>>, %arg5: memref<128x64xbf16, #tpu.memory_space<vmem>>, %arg6: memref<8x64xf32, #tpu.memory_space<vmem>>) attributes {dimension_semantics = [#tpu.dimension_semantics<parallel>, #tpu.dimension_semantics<arbitrary>], iteration_bounds = array<i64: 2, 1>, scalar_prefetch = 0 : i64, scratch_operands = 2 : i64, tpu.core_type = #tpu.core_type<tc>, window_params = [{transform_indices = @transform_0, window_bounds = array<i64: 1, 4, 8, 64>}, {transform_indices = @transform_1, window_bounds = array<i64: 8, 128>}, {transform_indices = @transform_2, window_bounds = array<i64: 1, 8, 64>}]} {
    %c0_i32 = arith.constant 0 : i32
    %0 = arith.cmpi eq, %arg1, %c0_i32 : i32
    %1 = arith.extui %0 : i1 to i32
    %c0_i32_0 = arith.constant 0 : i32
    %2 = arith.cmpi ne, %1, %c0_i32_0 : i32
    scf.if %2 {
      %cst_66 = arith.constant 0.000000e+00 : f32
      %181 = vector.broadcast %cst_66 : f32 to vector<8x64xf32>
      %c0_67 = arith.constant 0 : index
      %c0_68 = arith.constant 0 : index
      %182 = vector.load %arg6[%c0_67, %c0_68] : memref<8x64xf32, #tpu.memory_space<vmem>>, vector<8x64xf32>
      tpu.vector_store %arg6[%c0_67, %c0_68], %181 {strides = array<i32>} : memref<8x64xf32, #tpu.memory_space<vmem>>, vector<8x64xf32>,
    } else {
    }
    %c0 = arith.constant 0 : index
    %c0_1 = arith.constant 0 : index
    %c0_2 = arith.constant 0 : index
    %c0_3 = arith.constant 0 : index
    %3 = vector.load %arg2[%c0, %c0_1, %c0_2, %c0_3] : memref<1x4x8x64xf32, #tpu.memory_space<vmem>>, vector<1x4x8x64xf32>
    %4 = vector.shape_cast %3 : vector<1x4x8x64xf32> to vector<4x8x64xf32>
    %cst = arith.constant dense<0.000000e+00> : vector<8x64xf32>
    %5 = vector.multi_reduction <add>, %4, %cst [0] : vector<4x8x64xf32> to vector<8x64xf32>
    %cst_4 = arith.constant dense<0.000000e+00> : vector<8xf32>
    %6 = vector.multi_reduction <add>, %5, %cst_4 [1] : vector<8x64xf32> to vector<8xf32>
    %7 = vector.shape_cast %6 : vector<8xf32> to vector<8x1xf32>
    %8 = arith.mulf %4, %4 : vector<4x8x64xf32>
    %cst_5 = arith.constant dense<0.000000e+00> : vector<8x64xf32>
    %9 = vector.multi_reduction <add>, %8, %cst_5 [0] : vector<4x8x64xf32> to vector<8x64xf32>
    %cst_6 = arith.constant dense<0.000000e+00> : vector<8xf32>
    %10 = vector.multi_reduction <add>, %9, %cst_6 [1] : vector<8x64xf32> to vector<8xf32>
    %11 = vector.shape_cast %10 : vector<8xf32> to vector<8x1xf32>
    %cst_7 = arith.constant 2.560000e+02 : f32
    %12 = vector.broadcast %cst_7 : f32 to vector<8x1xf32>
    %13 = arith.divf %7, %12 : vector<8x1xf32>
    %cst_8 = arith.constant 2.560000e+02 : f32
    %14 = vector.broadcast %cst_8 : f32 to vector<8x1xf32>
    %15 = arith.divf %11, %14 : vector<8x1xf32>
    %16 = arith.mulf %13, %13 : vector<8x1xf32>
    %17 = arith.subf %15, %16 : vector<8x1xf32>
    %cst_9 = arith.constant 0.000000e+00 : f32
    %18 = vector.broadcast %cst_9 : f32 to vector<8x1xf32>
    %19 = arith.maximumf %17, %18 : vector<8x1xf32>
    %20 = vector.shape_cast %13 : vector<8x1xf32> to vector<1x8x1xf32>
    %21 = vector.broadcast %20 : vector<1x8x1xf32> to vector<4x8x64xf32>
    %22 = arith.subf %4, %21 : vector<4x8x64xf32>
    %cst_10 = arith.constant 9.99999974E-6 : f32
    %23 = vector.broadcast %cst_10 : f32 to vector<8x1xf32>
    %24 = arith.addf %19, %23 : vector<8x1xf32>
    %25 = math.rsqrt %24 : vector<8x1xf32>
    %26 = vector.shape_cast %25 : vector<8x1xf32> to vector<1x8x1xf32>
    %27 = vector.broadcast %26 : vector<1x8x1xf32> to vector<4x8x64xf32>
    %28 = arith.mulf %22, %27 : vector<4x8x64xf32>
    %cst_11 = arith.constant 0.000000e+00 : f32
    %29 = vector.broadcast %cst_11 : f32 to vector<4x8x64xf32>
    %30 = arith.cmpf oge, %28, %29 : vector<4x8x64xf32>
    %cst_12 = arith.constant 2.000000e-01 : f32
    %31 = vector.broadcast %cst_12 : f32 to vector<4x8x64xf32>
    %32 = arith.mulf %31, %28 : vector<4x8x64xf32>
    %33 = arith.select %30, %28, %32 : vector<4x8x64xi1>, vector<4x8x64xf32>
    %34 = arith.truncf %33 : vector<4x8x64xf32> to vector<4x8x64xbf16>
    %35 = tpu.iota {dimensions = array<i32: 1>} : vector<1x64xi32>
    %c8_i32 = arith.constant 8 : i32
    %c0_i32_13 = arith.constant 0 : i32
    %36 = arith.cmpi eq, %c8_i32, %c0_i32_13 : i32
    %c1_i32 = arith.constant 1 : i32
    %37 = arith.select %36, %c1_i32, %c8_i32 : i32
    %38 = vector.broadcast %37 : i32 to vector<1x64xi32>
    %39 = arith.remsi %35, %38 : vector<1x64xi32>
    %c0_i32_14 = arith.constant 0 : i32
    %40 = vector.broadcast %c0_i32_14 : i32 to vector<1x64xi32>
    %41 = arith.cmpi ne, %39, %40 : vector<1x64xi32>
    %c0_i32_15 = arith.constant 0 : i32
    %42 = vector.broadcast %c0_i32_15 : i32 to vector<1x64xi32>
    %43 = arith.cmpi slt, %39, %42 : vector<1x64xi32>
    %c0_i32_16 = arith.constant 0 : i32
    %44 = arith.cmpi slt, %37, %c0_i32_16 : i32
    %45 = vector.broadcast %44 : i1 to vector<1x64xi1>
    %46 = vector.broadcast %45 : vector<1x64xi1> to vector<1x64xi1>
    %47 = arith.xori %43, %46 : vector<1x64xi1>
    %48 = arith.andi %47, %41 : vector<1x64xi1>
    %49 = vector.broadcast %37 : i32 to vector<1x64xi32>
    %50 = arith.addi %39, %49 : vector<1x64xi32>
    %51 = arith.select %48, %50, %39 : vector<1x64xi1>, vector<1x64xi32>
    %c7_i32 = arith.constant 7 : i32
    %52 = vector.broadcast %c7_i32 : i32 to vector<1x64xi32>
    %53 = arith.cmpi slt, %51, %52 : vector<1x64xi32>
    %c0_i32_17 = arith.constant 0 : i32
    %54 = vector.broadcast %c0_i32_17 : i32 to vector<1x64xi32>
    %55 = arith.cmpi sgt, %51, %54 : vector<1x64xi32>
    %56 = vector.extract_strided_slice %34 {offsets = [3, 0, 0], sizes = [1, 8, 64], strides = [1, 1, 1]} : vector<4x8x64xbf16> to vector<1x8x64xbf16>
    %57 = vector.shape_cast %56 : vector<1x8x64xbf16> to vector<8x64xbf16>
    %cst_18 = arith.constant 0.000000e+00 : bf16
    %58 = vector.broadcast %cst_18 : bf16 to vector<8x9xbf16>
    %59 = vector.extract_strided_slice %57 {offsets = [0, 0], sizes = [8, 55], strides = [1, 1]} : vector<8x64xbf16> to vector<8x55xbf16>
    %60 = tpu.concatenate %58, %59 in 1 : vector<8x9xbf16>, vector<8x55xbf16> -> vector<8x64xbf16>
    %cst_19 = arith.constant 0.000000e+00 : bf16
    %61 = vector.broadcast %cst_19 : bf16 to vector<8x64xbf16>
    %62 = vector.shape_cast %55 : vector<1x64xi1> to vector<1x64xi1>
    %63 = vector.broadcast %62 : vector<1x64xi1> to vector<8x64xi1>
    %64 = arith.select %63, %60, %61 : vector<8x64xi1>, vector<8x64xbf16>
    %c0_20 = arith.constant 0 : index
    %c0_21 = arith.constant 0 : index
    %65 = vector.load %arg5[%c0_20, %c0_21] : memref<128x64xbf16, #tpu.memory_space<vmem>>, vector<8x64xbf16>
    tpu.vector_store %arg5[%c0_20, %c0_21], %64 {strides = array<i32>} : memref<128x64xbf16, #tpu.memory_space<vmem>>, vector<8x64xbf16>,
    %66 = vector.extract_strided_slice %34 {offsets = [2, 0, 0], sizes = [1, 8, 64], strides = [1, 1, 1]} : vector<4x8x64xbf16> to vector<1x8x64xbf16>
    %67 = vector.shape_cast %66 : vector<1x8x64xbf16> to vector<8x64xbf16>
    %cst_22 = arith.constant 0.000000e+00 : bf16
    %68 = vector.broadcast %cst_22 : bf16 to vector<8x8xbf16>
    %69 = vector.extract_strided_slice %67 {offsets = [0, 0], sizes = [8, 56], strides = [1, 1]} : vector<8x64xbf16> to vector<8x56xbf16>
    %70 = tpu.concatenate %68, %69 in 1 : vector<8x8xbf16>, vector<8x56xbf16> -> vector<8x64xbf16>
    %c8 = arith.constant 8 : index
    %c0_23 = arith.constant 0 : index
    %71 = vector.load %arg5[%c8, %c0_23] : memref<128x64xbf16, #tpu.memory_space<vmem>>, vector<8x64xbf16>
    tpu.vector_store %arg5[%c8, %c0_23], %70 {strides = array<i32>} : memref<128x64xbf16, #tpu.memory_space<vmem>>, vector<8x64xbf16>,
    %72 = vector.extract_strided_slice %34 {offsets = [3, 0, 0], sizes = [1, 8, 64], strides = [1, 1, 1]} : vector<4x8x64xbf16> to vector<1x8x64xbf16>
    %73 = vector.shape_cast %72 : vector<1x8x64xbf16> to vector<8x64xbf16>
    %cst_24 = arith.constant 0.000000e+00 : bf16
    %74 = vector.broadcast %cst_24 : bf16 to vector<8x8xbf16>
    %75 = vector.extract_strided_slice %73 {offsets = [0, 0], sizes = [8, 56], strides = [1, 1]} : vector<8x64xbf16> to vector<8x56xbf16>
    %76 = tpu.concatenate %74, %75 in 1 : vector<8x8xbf16>, vector<8x56xbf16> -> vector<8x64xbf16>
    %c16 = arith.constant 16 : index
    %c0_25 = arith.constant 0 : index
    %77 = vector.load %arg5[%c16, %c0_25] : memref<128x64xbf16, #tpu.memory_space<vmem>>, vector<8x64xbf16>
    tpu.vector_store %arg5[%c16, %c0_25], %76 {strides = array<i32>} : memref<128x64xbf16, #tpu.memory_space<vmem>>, vector<8x64xbf16>,
    %78 = vector.extract_strided_slice %34 {offsets = [2, 0, 0], sizes = [1, 8, 64], strides = [1, 1, 1]} : vector<4x8x64xbf16> to vector<1x8x64xbf16>
    %79 = vector.shape_cast %78 : vector<1x8x64xbf16> to vector<8x64xbf16>
    %cst_26 = arith.constant 0.000000e+00 : bf16
    %80 = vector.broadcast %cst_26 : bf16 to vector<8x7xbf16>
    %81 = vector.extract_strided_slice %79 {offsets = [0, 0], sizes = [8, 57], strides = [1, 1]} : vector<8x64xbf16> to vector<8x57xbf16>
    %82 = tpu.concatenate %80, %81 in 1 : vector<8x7xbf16>, vector<8x57xbf16> -> vector<8x64xbf16>
    %cst_27 = arith.constant 0.000000e+00 : bf16
    %83 = vector.broadcast %cst_27 : bf16 to vector<8x64xbf16>
    %84 = vector.shape_cast %53 : vector<1x64xi1> to vector<1x64xi1>
    %85 = vector.broadcast %84 : vector<1x64xi1> to vector<8x64xi1>
    %86 = arith.select %85, %82, %83 : vector<8x64xi1>, vector<8x64xbf16>
    %c24 = arith.constant 24 : index
    %c0_28 = arith.constant 0 : index
    %87 = vector.load %arg5[%c24, %c0_28] : memref<128x64xbf16, #tpu.memory_space<vmem>>, vector<8x64xbf16>
    tpu.vector_store %arg5[%c24, %c0_28], %86 {strides = array<i32>} : memref<128x64xbf16, #tpu.memory_space<vmem>>, vector<8x64xbf16>,
    %88 = vector.extract_strided_slice %34 {offsets = [1, 0, 0], sizes = [1, 8, 64], strides = [1, 1, 1]} : vector<4x8x64xbf16> to vector<1x8x64xbf16>
    %89 = vector.shape_cast %88 : vector<1x8x64xbf16> to vector<8x64xbf16>
    %cst_29 = arith.constant 0.000000e+00 : bf16
    %90 = vector.broadcast %cst_29 : bf16 to vector<8x1xbf16>
    %91 = vector.extract_strided_slice %89 {offsets = [0, 0], sizes = [8, 63], strides = [1, 1]} : vector<8x64xbf16> to vector<8x63xbf16>
    %92 = tpu.concatenate %90, %91 in 1 : vector<8x1xbf16>, vector<8x63xbf16> -> vector<8x64xbf16>
    %cst_30 = arith.constant 0.000000e+00 : bf16
    %93 = vector.broadcast %cst_30 : bf16 to vector<8x64xbf16>
    %94 = vector.shape_cast %55 : vector<1x64xi1> to vector<1x64xi1>
    %95 = vector.broadcast %94 : vector<1x64xi1> to vector<8x64xi1>
    %96 = arith.select %95, %92, %93 : vector<8x64xi1>, vector<8x64xbf16>
    %c32 = arith.constant 32 : index
    %c0_31 = arith.constant 0 : index
    %97 = vector.load %arg5[%c32, %c0_31] : memref<128x64xbf16, #tpu.memory_space<vmem>>, vector<8x64xbf16>
    tpu.vector_store %arg5[%c32, %c0_31], %96 {strides = array<i32>} : memref<128x64xbf16, #tpu.memory_space<vmem>>, vector<8x64xbf16>,
    %98 = vector.extract_strided_slice %34 {offsets = [0, 0, 0], sizes = [1, 8, 64], strides = [1, 1, 1]} : vector<4x8x64xbf16> to vector<1x8x64xbf16>
    %99 = vector.shape_cast %98 : vector<1x8x64xbf16> to vector<8x64xbf16>
    %c40 = arith.constant 40 : index
    %c0_32 = arith.constant 0 : index
    %100 = vector.load %arg5[%c40, %c0_32] : memref<128x64xbf16, #tpu.memory_space<vmem>>, vector<8x64xbf16>
    tpu.vector_store %arg5[%c40, %c0_32], %99 {strides = array<i32>} : memref<128x64xbf16, #tpu.memory_space<vmem>>, vector<8x64xbf16>,
    %101 = vector.extract_strided_slice %34 {offsets = [1, 0, 0], sizes = [1, 8, 64], strides = [1, 1, 1]} : vector<4x8x64xbf16> to vector<1x8x64xbf16>
    %102 = vector.shape_cast %101 : vector<1x8x64xbf16> to vector<8x64xbf16>
    %c48 = arith.constant 48 : index
    %c0_33 = arith.constant 0 : index
    %103 = vector.load %arg5[%c48, %c0_33] : memref<128x64xbf16, #tpu.memory_space<vmem>>, vector<8x64xbf16>
    tpu.vector_store %arg5[%c48, %c0_33], %102 {strides = array<i32>} : memref<128x64xbf16, #tpu.memory_space<vmem>>, vector<8x64xbf16>,
    %104 = vector.extract_strided_slice %34 {offsets = [0, 0, 0], sizes = [1, 8, 64], strides = [1, 1, 1]} : vector<4x8x64xbf16> to vector<1x8x64xbf16>
    %105 = vector.shape_cast %104 : vector<1x8x64xbf16> to vector<8x64xbf16>
    %106 = vector.extract_strided_slice %105 {offsets = [0, 1], sizes = [8, 63], strides = [1, 1]} : vector<8x64xbf16> to vector<8x63xbf16>
    %cst_34 = arith.constant 0.000000e+00 : bf16
    %107 = vector.broadcast %cst_34 : bf16 to vector<8x1xbf16>
    %108 = tpu.concatenate %106, %107 in 1 : vector<8x63xbf16>, vector<8x1xbf16> -> vector<8x64xbf16>
    %cst_35 = arith.constant 0.000000e+00 : bf16
    %109 = vector.broadcast %cst_35 : bf16 to vector<8x64xbf16>
    %110 = vector.shape_cast %53 : vector<1x64xi1> to vector<1x64xi1>
    %111 = vector.broadcast %110 : vector<1x64xi1> to vector<8x64xi1>
    %112 = arith.select %111, %108, %109 : vector<8x64xi1>, vector<8x64xbf16>
    %c56 = arith.constant 56 : index
    %c0_36 = arith.constant 0 : index
    %113 = vector.load %arg5[%c56, %c0_36] : memref<128x64xbf16, #tpu.memory_space<vmem>>, vector<8x64xbf16>
    tpu.vector_store %arg5[%c56, %c0_36], %112 {strides = array<i32>} : memref<128x64xbf16, #tpu.memory_space<vmem>>, vector<8x64xbf16>,
    %114 = vector.extract_strided_slice %34 {offsets = [3, 0, 0], sizes = [1, 8, 64], strides = [1, 1, 1]} : vector<4x8x64xbf16> to vector<1x8x64xbf16>
    %115 = vector.shape_cast %114 : vector<1x8x64xbf16> to vector<8x64xbf16>
    %cst_37 = arith.constant 0.000000e+00 : bf16
    %116 = vector.broadcast %cst_37 : bf16 to vector<8x1xbf16>
    %117 = vector.extract_strided_slice %115 {offsets = [0, 0], sizes = [8, 63], strides = [1, 1]} : vector<8x64xbf16> to vector<8x63xbf16>
    %118 = tpu.concatenate %116, %117 in 1 : vector<8x1xbf16>, vector<8x63xbf16> -> vector<8x64xbf16>
    %cst_38 = arith.constant 0.000000e+00 : bf16
    %119 = vector.broadcast %cst_38 : bf16 to vector<8x64xbf16>
    %120 = vector.shape_cast %55 : vector<1x64xi1> to vector<1x64xi1>
    %121 = vector.broadcast %120 : vector<1x64xi1> to vector<8x64xi1>
    %122 = arith.select %121, %118, %119 : vector<8x64xi1>, vector<8x64xbf16>
    %c64 = arith.constant 64 : index
    %c0_39 = arith.constant 0 : index
    %123 = vector.load %arg5[%c64, %c0_39] : memref<128x64xbf16, #tpu.memory_space<vmem>>, vector<8x64xbf16>
    tpu.vector_store %arg5[%c64, %c0_39], %122 {strides = array<i32>} : memref<128x64xbf16, #tpu.memory_space<vmem>>, vector<8x64xbf16>,
    %124 = vector.extract_strided_slice %34 {offsets = [2, 0, 0], sizes = [1, 8, 64], strides = [1, 1, 1]} : vector<4x8x64xbf16> to vector<1x8x64xbf16>
    %125 = vector.shape_cast %124 : vector<1x8x64xbf16> to vector<8x64xbf16>
    %c72 = arith.constant 72 : index
    %c0_40 = arith.constant 0 : index
    %126 = vector.load %arg5[%c72, %c0_40] : memref<128x64xbf16, #tpu.memory_space<vmem>>, vector<8x64xbf16>
    tpu.vector_store %arg5[%c72, %c0_40], %125 {strides = array<i32>} : memref<128x64xbf16, #tpu.memory_space<vmem>>, vector<8x64xbf16>,
    %127 = vector.extract_strided_slice %34 {offsets = [3, 0, 0], sizes = [1, 8, 64], strides = [1, 1, 1]} : vector<4x8x64xbf16> to vector<1x8x64xbf16>
    %128 = vector.shape_cast %127 : vector<1x8x64xbf16> to vector<8x64xbf16>
    %c80 = arith.constant 80 : index
    %c0_41 = arith.constant 0 : index
    %129 = vector.load %arg5[%c80, %c0_41] : memref<128x64xbf16, #tpu.memory_space<vmem>>, vector<8x64xbf16>
    tpu.vector_store %arg5[%c80, %c0_41], %128 {strides = array<i32>} : memref<128x64xbf16, #tpu.memory_space<vmem>>, vector<8x64xbf16>,
    %130 = vector.extract_strided_slice %34 {offsets = [2, 0, 0], sizes = [1, 8, 64], strides = [1, 1, 1]} : vector<4x8x64xbf16> to vector<1x8x64xbf16>
    %131 = vector.shape_cast %130 : vector<1x8x64xbf16> to vector<8x64xbf16>
    %132 = vector.extract_strided_slice %131 {offsets = [0, 1], sizes = [8, 63], strides = [1, 1]} : vector<8x64xbf16> to vector<8x63xbf16>
    %cst_42 = arith.constant 0.000000e+00 : bf16
    %133 = vector.broadcast %cst_42 : bf16 to vector<8x1xbf16>
    %134 = tpu.concatenate %132, %133 in 1 : vector<8x63xbf16>, vector<8x1xbf16> -> vector<8x64xbf16>
    %cst_43 = arith.constant 0.000000e+00 : bf16
    %135 = vector.broadcast %cst_43 : bf16 to vector<8x64xbf16>
    %136 = vector.shape_cast %53 : vector<1x64xi1> to vector<1x64xi1>
    %137 = vector.broadcast %136 : vector<1x64xi1> to vector<8x64xi1>
    %138 = arith.select %137, %134, %135 : vector<8x64xi1>, vector<8x64xbf16>
    %c88 = arith.constant 88 : index
    %c0_44 = arith.constant 0 : index
    %139 = vector.load %arg5[%c88, %c0_44] : memref<128x64xbf16, #tpu.memory_space<vmem>>, vector<8x64xbf16>
    tpu.vector_store %arg5[%c88, %c0_44], %138 {strides = array<i32>} : memref<128x64xbf16, #tpu.memory_space<vmem>>, vector<8x64xbf16>,
    %140 = vector.extract_strided_slice %34 {offsets = [1, 0, 0], sizes = [1, 8, 64], strides = [1, 1, 1]} : vector<4x8x64xbf16> to vector<1x8x64xbf16>
    %141 = vector.shape_cast %140 : vector<1x8x64xbf16> to vector<8x64xbf16>
    %142 = vector.extract_strided_slice %141 {offsets = [0, 7], sizes = [8, 57], strides = [1, 1]} : vector<8x64xbf16> to vector<8x57xbf16>
    %cst_45 = arith.constant 0.000000e+00 : bf16
    %143 = vector.broadcast %cst_45 : bf16 to vector<8x7xbf16>
    %144 = tpu.concatenate %142, %143 in 1 : vector<8x57xbf16>, vector<8x7xbf16> -> vector<8x64xbf16>
    %cst_46 = arith.constant 0.000000e+00 : bf16
    %145 = vector.broadcast %cst_46 : bf16 to vector<8x64xbf16>
    %146 = vector.shape_cast %55 : vector<1x64xi1> to vector<1x64xi1>
    %147 = vector.broadcast %146 : vector<1x64xi1> to vector<8x64xi1>
    %148 = arith.select %147, %144, %145 : vector<8x64xi1>, vector<8x64xbf16>
    %c96 = arith.constant 96 : index
    %c0_47 = arith.constant 0 : index
    %149 = vector.load %arg5[%c96, %c0_47] : memref<128x64xbf16, #tpu.memory_space<vmem>>, vector<8x64xbf16>
    tpu.vector_store %arg5[%c96, %c0_47], %148 {strides = array<i32>} : memref<128x64xbf16, #tpu.memory_space<vmem>>, vector<8x64xbf16>,
    %150 = vector.extract_strided_slice %34 {offsets = [0, 0, 0], sizes = [1, 8, 64], strides = [1, 1, 1]} : vector<4x8x64xbf16> to vector<1x8x64xbf16>
    %151 = vector.shape_cast %150 : vector<1x8x64xbf16> to vector<8x64xbf16>
    %152 = vector.extract_strided_slice %151 {offsets = [0, 8], sizes = [8, 56], strides = [1, 1]} : vector<8x64xbf16> to vector<8x56xbf16>
    %cst_48 = arith.constant 0.000000e+00 : bf16
    %153 = vector.broadcast %cst_48 : bf16 to vector<8x8xbf16>
    %154 = tpu.concatenate %152, %153 in 1 : vector<8x56xbf16>, vector<8x8xbf16> -> vector<8x64xbf16>
    %c104 = arith.constant 104 : index
    %c0_49 = arith.constant 0 : index
    %155 = vector.load %arg5[%c104, %c0_49] : memref<128x64xbf16, #tpu.memory_space<vmem>>, vector<8x64xbf16>
    tpu.vector_store %arg5[%c104, %c0_49], %154 {strides = array<i32>} : memref<128x64xbf16, #tpu.memory_space<vmem>>, vector<8x64xbf16>,
    %156 = vector.extract_strided_slice %34 {offsets = [1, 0, 0], sizes = [1, 8, 64], strides = [1, 1, 1]} : vector<4x8x64xbf16> to vector<1x8x64xbf16>
    %157 = vector.shape_cast %156 : vector<1x8x64xbf16> to vector<8x64xbf16>
    %158 = vector.extract_strided_slice %157 {offsets = [0, 8], sizes = [8, 56], strides = [1, 1]} : vector<8x64xbf16> to vector<8x56xbf16>
    %cst_50 = arith.constant 0.000000e+00 : bf16
    %159 = vector.broadcast %cst_50 : bf16 to vector<8x8xbf16>
    %160 = tpu.concatenate %158, %159 in 1 : vector<8x56xbf16>, vector<8x8xbf16> -> vector<8x64xbf16>
    %c112 = arith.constant 112 : index
    %c0_51 = arith.constant 0 : index
    %161 = vector.load %arg5[%c112, %c0_51] : memref<128x64xbf16, #tpu.memory_space<vmem>>, vector<8x64xbf16>
    tpu.vector_store %arg5[%c112, %c0_51], %160 {strides = array<i32>} : memref<128x64xbf16, #tpu.memory_space<vmem>>, vector<8x64xbf16>,
    %162 = vector.extract_strided_slice %34 {offsets = [0, 0, 0], sizes = [1, 8, 64], strides = [1, 1, 1]} : vector<4x8x64xbf16> to vector<1x8x64xbf16>
    %163 = vector.shape_cast %162 : vector<1x8x64xbf16> to vector<8x64xbf16>
    %164 = vector.extract_strided_slice %163 {offsets = [0, 9], sizes = [8, 55], strides = [1, 1]} : vector<8x64xbf16> to vector<8x55xbf16>
    %cst_52 = arith.constant 0.000000e+00 : bf16
    %165 = vector.broadcast %cst_52 : bf16 to vector<8x9xbf16>
    %166 = tpu.concatenate %164, %165 in 1 : vector<8x55xbf16>, vector<8x9xbf16> -> vector<8x64xbf16>
    %cst_53 = arith.constant 0.000000e+00 : bf16
    %167 = vector.broadcast %cst_53 : bf16 to vector<8x64xbf16>
    %168 = vector.shape_cast %53 : vector<1x64xi1> to vector<1x64xi1>
    %169 = vector.broadcast %168 : vector<1x64xi1> to vector<8x64xi1>
    %170 = arith.select %169, %166, %167 : vector<8x64xi1>, vector<8x64xbf16>
    %c120 = arith.constant 120 : index
    %c0_54 = arith.constant 0 : index
    %171 = vector.load %arg5[%c120, %c0_54] : memref<128x64xbf16, #tpu.memory_space<vmem>>, vector<8x64xbf16>
    tpu.vector_store %arg5[%c120, %c0_54], %170 {strides = array<i32>} : memref<128x64xbf16, #tpu.memory_space<vmem>>, vector<8x64xbf16>,
    %c0_55 = arith.constant 0 : index
    %c0_56 = arith.constant 0 : index
    %172 = vector.load %arg6[%c0_55, %c0_56] : memref<8x64xf32, #tpu.memory_space<vmem>>, vector<8x64xf32>
    %c0_57 = arith.constant 0 : index
    %c0_58 = arith.constant 0 : index
    %173 = vector.load %arg3[%c0_57, %c0_58] : memref<8x128xbf16, #tpu.memory_space<vmem>>, vector<8x128xbf16>
    %c0_59 = arith.constant 0 : index
    %c0_60 = arith.constant 0 : index
    %174 = vector.load %arg5[%c0_59, %c0_60] : memref<128x64xbf16, #tpu.memory_space<vmem>>, vector<128x64xbf16>
    %cst_61 = arith.constant dense<0.000000e+00> : vector<8x64xf32>
    %175 = tpu.matmul %173, %174, %cst_61 {dimension_numbers = #tpu.dot_dimension_numbers<[1], [0], [0], [1], [0, 0, 1, 1], [], []>} : vector<8x128xbf16>, vector<128x64xbf16>, vector<8x64xf32> -> vector<8x64xf32>
    %176 = arith.addf %172, %175 : vector<8x64xf32>
    %c0_62 = arith.constant 0 : index
    %c0_63 = arith.constant 0 : index
    %177 = vector.load %arg6[%c0_62, %c0_63] : memref<8x64xf32, #tpu.memory_space<vmem>>, vector<8x64xf32>
    tpu.vector_store %arg6[%c0_62, %c0_63], %176 {strides = array<i32>} : memref<8x64xf32, #tpu.memory_space<vmem>>, vector<8x64xf32>,
    %c0_i32_64 = arith.constant 0 : i32
    %178 = arith.cmpi eq, %arg1, %c0_i32_64 : i32
    %179 = arith.extui %178 : i1 to i32
    %c0_i32_65 = arith.constant 0 : i32
    %180 = arith.cmpi ne, %179, %c0_i32_65 : i32
    scf.if %180 {
      %c0_66 = arith.constant 0 : index
      %c0_67 = arith.constant 0 : index
      %181 = vector.load %arg6[%c0_66, %c0_67] : memref<8x64xf32, #tpu.memory_space<vmem>>, vector<8x64xf32>
      %c0_68 = arith.constant 0 : index
      %c0_69 = arith.constant 0 : index
      %c0_70 = arith.constant 0 : index
      %182 = vector.load %arg4[%c0_68, %c0_69, %c0_70] : memref<1x8x64xf32, #tpu.memory_space<vmem>>, vector<1x8x64xf32>
      %183 = vector.shape_cast %182 : vector<1x8x64xf32> to vector<8x64xf32>
      %184 = vector.shape_cast %181 : vector<8x64xf32> to vector<1x8x64xf32>
      tpu.vector_store %arg4[%c0_68, %c0_69, %c0_70], %184 {strides = array<i32>} : memref<1x8x64xf32, #tpu.memory_space<vmem>>, vector<1x8x64xf32>,
    } else {
    }
    return
  }
  func.func @transform_0(%arg0: i32, %arg1: i32) -> (i32, i32, i32, i32) {
    %c0_i32 = arith.constant 0 : i32
    %c0_i32_0 = arith.constant 0 : i32
    %c0_i32_1 = arith.constant 0 : i32
    return %arg0, %c0_i32, %arg1, %c0_i32_0 : i32, i32, i32, i32
  }
  func.func @transform_1(%arg0: i32, %arg1: i32) -> (i32, i32) {
    %c0_i32 = arith.constant 0 : i32
    %c0_i32_0 = arith.constant 0 : i32
    return %c0_i32, %arg1 : i32, i32
  }
  func.func @transform_2(%arg0: i32, %arg1: i32) -> (i32, i32, i32) {
    %c0_i32 = arith.constant 0 : i32
    %c0_i32_0 = arith.constant 0 : i32
    %c0_i32_1 = arith.constant 0 : i32
    return %arg0, %c0_i32, %c0_i32_0 : i32, i32, i32
  }
}

</mosaic_0001>

<llo_original>
// kernel: tpu_custom_call.1
$region0: #{tpu_custom_call.1}
  #allocation0 [shape = 'u32[]', space=smem, size = 0x4, offset = 0x4, fixed_abs, tag = 'smem constant byte address 0x4 - core index']
  #allocation1 [shape = 'u32[144,128]{1,0:T(1,128)}', space=vmem, size = 0x12000, scoped, tag = 'internal scratch']
  #allocation2 [shape = 'bf16[128,64]{1,0:T(16,128)(2,1)}', space=vmem, size = 0x8000, scoped, tag = 'scratch operand']
  #allocation3 [shape = 'f32[8,64]{1,0:T(8,128)}', space=vmem, size = 0x1000, scoped, tag = 'scratch operand']
  %s0 = inlined_call_operand.hbm [shape: f32[2,4,8,64], index: 0, kind: input, shape index: {}]
  %s1 = inlined_call_operand.hbm [shape: bf16[8,128], index: 1, kind: input, shape index: {}]
  %s2 = inlined_call_operand.hbm [shape: f32[2,8,64], index: 2, kind: output, shape index: {}]
  %s3 = sld [smem:[#allocation0]]
  $region57: #{tpu_custom_call.1} parent=0
    _
  %s5 = ssub.s32 1, %s3
  %s6 = scalar_select 0, %s5, %s3
  $region1: #{tpu_custom_call.1} parent=0
    #allocation4 [shape = 'u8[32768]{0}', space=vmem, size = 0x8000, scoped, tag = 'input window, operand 0']
    #allocation5 [shape = 's32[2]{0}', space=sflag, size = 0x8, scoped, tag = 'scoped memory for tpu_custom_call.1']
    #allocation6 [shape = 's32[2]{0}', space=sflag, size = 0x8, scoped, tag = 'scoped memory for tpu_custom_call.1']
    #allocation7 [shape = 'u8[2048]{0}', space=vmem, size = 0x800, scoped, tag = 'input window, operand 1, single buffered']
    #allocation8 [shape = 's32[1]{0}', space=sflag, size = 0x4, scoped, tag = 'scoped memory for tpu_custom_call.1']
    #allocation9 [shape = 'u8[8192]{0}', space=vmem, size = 0x2000, scoped, tag = 'output window, operand 0']
    %7 = vsyncpa [#allocation5], 0
    %s8 = scalar_lea.sflag [#allocation5], 1
    %9 = vsyncpa %s8, 0
    %10 = vsyncpa [#allocation8], 0
    %11 = vsyncpa [#allocation6], 0
    %s12 = scalar_lea.sflag [#allocation6], 1
    %13 = vsyncpa %s12, 0
    loop: start=0, step=1, limit=4
    $region2: #{tpu_custom_call.1} parent=1 // loop_pre_header
      _
    $region3: #{tpu_custom_call.1} parent=1 // loop_header
      %s15 = sphi 0, %s19
      %p16 = scmp.ge.s32.totalorder %s15, 4
      %s22 = sphi 0, %s34
      %s23 = sphi 0, %s30
      %s24 = sphi 0, %s22
      %s25 = sphi 0, %s23
      %s26 = sphi 0, %s24
      %s27 = sphi 0, %s25
      %s39 = sphi 0, %s41
      %s42 = sphi 0, %s39
      %s43 = sphi 0, %s42
      %s59 = sphi 0, %s43
      %s65 = sphi 0, %s67
      %s68 = sphi 0, %s65
      %s69 = sphi 0, %s68
      %s85 = sphi 0, %s69
      %s91 = sphi 0, %s93
      %s94 = sphi 0, %s91
      %s95 = sphi 0, %s94
      %s111 = sphi 0, %s95
    $region4: #{tpu_custom_call.1} parent=1 // loop_header_branch
      %18 = sbr.rel (%p16) target = $region8
    $region5: #{tpu_custom_call.1} parent=1 // loop_body
      %s20 = ssub.s32 %s15, 1
      %s21 = ssub.s32 %s15, 2
      %s28 = sadd.s32 1, %s23
      %p29 = scmp.ge.s32.totalorder %s28, 1
      %s30 = scalar_select %p29, 0, %s28
      %s31 = sadd.s32 1, %s22
      %s32 = scalar_select %p29, %s31, %s22
      %p33 = scmp.ge.s32.totalorder %s32, 2
      %s34 = scalar_select %p33, 0, %s32
      %s35 = ssub.s32 %s22, %s34
      %s36 = ssub.s32 %s23, %s30
      %s37 = sor.u32 %s35, %s36
      %p38 = scmp.eq.s32.totalorder %s37, 0
      %s40 = sadd.s32 %s39, 1
      %s41 = scalar_select %p38, %s39, %s40
      %p44 = pneg %p38
      %p45 = scmp.eq.s32.totalorder %s15, 1
      %p46 = por %p44, %p45
      %p47 = scmp.ne.s32.totalorder %s39, %s42
      %p48 = scmp.eq.s32.totalorder %s15, 0
      %p49 = por %p47, %p48
      %p50 = scmp.ne.s32.totalorder %s39, %s42
      %p51 = scmp.eq.s32.totalorder %s20, 1
      %p52 = por %p50, %p51
      %p53 = scmp.ne.s32.totalorder %s42, %s43
      %p54 = scmp.eq.s32.totalorder %s20, 0
      %p55 = por %p53, %p54
      %p56 = scmp.ne.s32.totalorder %s42, %s43
      %p57 = scmp.eq.s32.totalorder %s21, 1
      %p58 = por %p56, %p57
      %p60 = scmp.ne.s32.totalorder %s43, %s59
      %p61 = scmp.eq.s32.totalorder %s21, 0
      %p62 = por %p60, %p61
      %s63 = ssub.s32 %s23, %s30
      %p64 = scmp.eq.s32.totalorder %s63, 0
      %s66 = sadd.s32 %s65, 1
      %s67 = scalar_select %p64, %s65, %s66
      %p70 = pneg %p64
      %p71 = scmp.eq.s32.totalorder %s15, 1
      %p72 = por %p70, %p71
      %p73 = scmp.ne.s32.totalorder %s65, %s68
      %p74 = scmp.eq.s32.totalorder %s15, 0
      %p75 = por %p73, %p74
      %p76 = scmp.ne.s32.totalorder %s65, %s68
      %p77 = scmp.eq.s32.totalorder %s20, 1
      %p78 = por %p76, %p77
      %p79 = scmp.ne.s32.totalorder %s68, %s69
      %p80 = scmp.eq.s32.totalorder %s20, 0
      %p81 = por %p79, %p80
      %p82 = scmp.ne.s32.totalorder %s68, %s69
      %p83 = scmp.eq.s32.totalorder %s21, 1
      %p84 = por %p82, %p83
      %p86 = scmp.ne.s32.totalorder %s69, %s85
      %p87 = scmp.eq.s32.totalorder %s21, 0
      %p88 = por %p86, %p87
      %s89 = ssub.s32 %s22, %s34
      %p90 = scmp.eq.s32.totalorder %s89, 0
      %s92 = sadd.s32 %s91, 1
      %s93 = scalar_select %p90, %s91, %s92
      %p96 = pneg %p90
      %p97 = scmp.eq.s32.totalorder %s15, 1
      %p98 = por %p96, %p97
      %p99 = scmp.ne.s32.totalorder %s91, %s94
      %p100 = scmp.eq.s32.totalorder %s15, 0
      %p101 = por %p99, %p100
      %p102 = scmp.ne.s32.totalorder %s91, %s94
      %p103 = scmp.eq.s32.totalorder %s20, 1
      %p104 = por %p102, %p103
      %p105 = scmp.ne.s32.totalorder %s94, %s95
      %p106 = scmp.eq.s32.totalorder %s20, 0
      %p107 = por %p105, %p106
      %p108 = scmp.ne.s32.totalorder %s94, %s95
      %p109 = scmp.eq.s32.totalorder %s21, 1
      %p110 = por %p108, %p109
      %p112 = scmp.ne.s32.totalorder %s95, %s111
      %p113 = scmp.eq.s32.totalorder %s21, 0
      %p114 = por %p112, %p113
      %p115 = scmp.le.s32.totalorder 1, %s15
      %p116 = scmp.lt.s32.totalorder %s15, 3
      %p117 = pnand %p115, %p116
      %p118 = pneg %p117
      // Predicated region
      $region9: #{tpu_custom_call.1} parent=5 // pred_check
        _
      $region10: #{tpu_custom_call.1} parent=5 // pred_check_branch
        %120 = sbr.rel (%p117) target = $region12
      $region11: #{tpu_custom_call.1} parent=5 // pred_region
        %s121 = ssub.s32 %s15, 1
        // Predicated region
        $region13: #{tpu_custom_call.1} parent=11 // pred_check
          %p122 = pneg %p81
        $region14: #{tpu_custom_call.1} parent=11 // pred_check_branch
          %124 = sbr.rel (%p122) target = $region16
        $region15: #{tpu_custom_call.1} parent=11 // pred_region
          %s126 = ssub.s32 64, 64
          %127 = vsyncadd [#allocation8], %s126
          %s128 = smul.addr %s25, 64
          %s129 = scalar_lea.hbm %s1, %s128
          %s131 = sshll.u32 [#allocation7], 4
          %s132 = int_to_ptr.vmem [resolvable:$true] %s131
          %134 = dma.hbm_to_vmem [thread:$0]  %s129, 64, %s132, [#allocation8]
        $region16: #{tpu_custom_call.1} parent=11 // pred_fallthru
          _
      $region12: #{tpu_custom_call.1} parent=5 // pred_fallthru
        _
      %p135 = scmp.lt.s32.totalorder %s15, 2
      // Predicated region
      $region17: #{tpu_custom_call.1} parent=5 // pred_check
        %p136 = pneg %p135
      $region18: #{tpu_custom_call.1} parent=5 // pred_check_branch
        %138 = sbr.rel (%p136) target = $region20
      $region19: #{tpu_custom_call.1} parent=5 // pred_region
        // Predicated region
        $region21: #{tpu_custom_call.1} parent=19 // pred_check
          %p139 = pneg %p49
        $region22: #{tpu_custom_call.1} parent=19 // pred_check_branch
          %141 = sbr.rel (%p139) target = $region24
        $region23: #{tpu_custom_call.1} parent=19 // pred_region
          %s142 = sand.u32 %s39, 1
          %s143 = scalar_lea.sflag [#allocation5], %s142
          %s144 = sand.u32 %s39, 1
          %s145 = smul.addr %s144, 32
          %s146 = scalar_lea.vmem [#allocation4], %s145
          %s148 = ssub.s32 512, 512
          %149 = vsyncadd %s143, %s148
          %s150 = smul.addr %s22, 4
          %s151 = sadd.s32 %s23, %s150
          %s152 = smul.addr %s151, 128
          %s153 = scalar_lea.hbm %s0, %s152
          %s154 = sshll.u32 %s146, 4
          %s155 = int_to_ptr.vmem [resolvable:$true] %s154
          %160 = dma.hbm_to_vmem [thread:$0]  %s153, 512, %s155, %s143, 128, 128, 8
        $region24: #{tpu_custom_call.1} parent=19 // pred_fallthru
          _
      $region20: #{tpu_custom_call.1} parent=5 // pred_fallthru
        _
      %p161 = scmp.le.s32.totalorder 1, %s15
      %p162 = scmp.lt.s32.totalorder %s15, 3
      %p163 = pnand %p161, %p162
      %p164 = pneg %p163
      // Predicated region
      $region25: #{tpu_custom_call.1} parent=5 // pred_check
        _
      $region26: #{tpu_custom_call.1} parent=5 // pred_check_branch
        %166 = sbr.rel (%p163) target = $region28
      $region27: #{tpu_custom_call.1} parent=5 // pred_region
        %s167 = ssub.s32 %s15, 1
        %s168 = sand.u32 %s42, 1
        %s169 = scalar_lea.sflag [#allocation5], %s168
        %s170 = sand.u32 %s42, 1
        %s171 = smul.addr %s170, 32
        %s172 = scalar_lea.vmem [#allocation4], %s171
        // Predicated region
        $region29: #{tpu_custom_call.1} parent=27 // pred_check
          %p173 = pneg %p55
        $region30: #{tpu_custom_call.1} parent=27 // pred_check_branch
          %175 = sbr.rel (%p173) target = $region32
        $region31: #{tpu_custom_call.1} parent=27 // pred_region
          %176 = dma.done %s169, 512
        $region32: #{tpu_custom_call.1} parent=27 // pred_fallthru
          _
        // Predicated region
        $region33: #{tpu_custom_call.1} parent=27 // pred_check
          %p177 = pneg %p81
        $region34: #{tpu_custom_call.1} parent=27 // pred_check_branch
          %179 = sbr.rel (%p177) target = $region36
        $region35: #{tpu_custom_call.1} parent=27 // pred_region
          %180 = dma.done [#allocation8], 64
        $region36: #{tpu_custom_call.1} parent=27 // pred_fallthru
          _
        %s181 = sand.u32 %s42, 1
        %s182 = scalar_lea.sflag [#allocation5], %s181
        %s183 = sand.u32 %s42, 1
        %s184 = smul.addr %s183, 32
        %s185 = scalar_lea.vmem [#allocation4], %s184
        %p186 = pneg %p55
        %p187 = pneg %p52
        %p188 = pneg %p81
        %p189 = pneg %p78
        %p190 = pneg %p107
        %p191 = pneg %p104
        %s192 = sand.u32 %s94, 1
        %s193 = scalar_lea.sflag [#allocation6], %s192
        %s194 = sand.u32 %s94, 1
        %s195 = smul.addr %s194, 8
        %s196 = scalar_lea.vmem [#allocation9], %s195
        %p198 = scmp.eq.s32.totalorder %s25, 0
        // Predicated region
        $region37: #{tpu_custom_call.1} parent=27 // pred_check
          %p199 = pneg %p198
        $region38: #{tpu_custom_call.1} parent=27 // pred_check_branch
          %201 = sbr.rel (%p199) target = $region40
        $region39: #{tpu_custom_call.1} parent=27 // pred_region
          %vm202 = vcmask 523264
          %203 = vst.msk [vmem:[#allocation3] sm:$0xff] %vm202, 0.0
        $region40: #{tpu_custom_call.1} parent=27 // pred_fallthru
          _
        %v204 = vld [vmem:[%s172] sm:$0xff]
        %v205 = vld [vmem:[%s172 + $0x8] sm:$0xff]
        %v206 = vld [vmem:[%s172 + $0x10] sm:$0xff]
        %v207 = vld [vmem:[%s172 + $0x18] sm:$0xff]
        %vm208 = vcmask 523264
        %v209 = vsel %vm208, %v204, 0.0
        %v210 = vsel %vm208, %v205, 0.0
        %v211 = vadd.f32 %v209, %v210
        %v212 = vsel %vm208, %v206, 0.0
        %v213 = vadd.f32 %v211, %v212
        %v214 = vsel %vm208, %v207, 0.0
        %v215 = vadd.f32 %v213, %v214
        %v216 = vsel %vm208, %v215, 0.0
        %217 = vadd.xlane.f32.xlu0 %v216
        %v218 = vpop.xlane.xlu0 %217
        %v219 = vmul.f32 %v204, %v204
        %v220 = vmul.f32 %v205, %v205
        %v221 = vmul.f32 %v206, %v206
        %v222 = vmul.f32 %v207, %v207
        %v223 = vsel %vm208, %v219, 0.0
        %v224 = vsel %vm208, %v220, 0.0
        %v225 = vadd.f32 %v223, %v224
        %v226 = vsel %vm208, %v221, 0.0
        %v227 = vadd.f32 %v225, %v226
        %v228 = vsel %vm208, %v222, 0.0
        %v229 = vadd.f32 %v227, %v228
        %v230 = vsel %vm208, %v229, 0.0
        %231 = vadd.xlane.f32.xlu0 %v230
        %v232 = vpop.xlane.xlu0 %231
        %v233 = vrcp.pop 256.0
        %v234 = vmul.f32 %v218, %v233
        %v235 = vmul.f32 %v232, %v233
        %v236 = vmul.f32 %v234, %v234
        %v237 = vsub.f32 %v235, %v236
        %v238 = vmax.f32 %v237, 0.0
        %v239 = vsub.f32 %v204, %v234
        %v240 = vsub.f32 %v205, %v234
        %v241 = vsub.f32 %v206, %v234
        %v242 = vsub.f32 %v207, %v234
        %v243 = vadd.f32 %v238, 1e-05
        %v244 = vrsqrt.pop %v243
        %v245 = vmul.f32 %v239, %v244
        %v246 = vmul.f32 %v240, %v244
        %v247 = vmul.f32 %v241, %v244
        %v248 = vmul.f32 %v242, %v244
        %vm249 = vcmp.ge.f32.partialorder %v245, 0.0
        %vm250 = vcmp.ge.f32.partialorder %v246, 0.0
        %vm251 = vcmp.ge.f32.partialorder %v247, 0.0
        %vm252 = vcmp.ge.f32.partialorder %v248, 0.0
        %v253 = vmul.f32 %v245, 0.2
        %v254 = vmul.f32 %v246, 0.2
        %v255 = vmul.f32 %v247, 0.2
        %v256 = vmul.f32 %v248, 0.2
        %v257 = vsel %vm249, %v245, %v253
        %v258 = vsel %vm250, %v246, %v254
        %v259 = vsel %vm251, %v247, %v255
        %v260 = vsel %vm252, %v248, %v256
        %v261 = vpack.c.bf16 %v257, %v257
        %v262 = vpack.c.bf16 %v258, %v258
        %v263 = vpack.c.bf16 %v259, %v259
        %v264 = vpack.c.bf16 %v260, %v260
        %v265 = vlaneseq
        %v266 = vand.u32 %v265, 127
        %vm267 = vcmp.lt.s32.totalorder %v266, 0
        %v268 = vsub.s32 0, %v266
        %v269 = vsel %vm267, %v268, %v266
        %v270 = vshrl.u32 %v269, 3
        %v271 = vand.u32 %v269, 7
        %v272 = vsub.s32 0, %v271
        %v273 = vsel %vm267, %v272, %v271
        %vm274 = vcmp.ne.s32.totalorder %v273, 0
        %vm275 = vcmp.lt.s32.totalorder %v273, 0
        %vm276 = vmand %vm275, %vm274
        %v277 = vadd.s32 %v273, 8
        %v278 = vsel %vm276, %v277, %v273
        %vm279 = vcmp.lt.s32.totalorder %v278, 7
        %vm280 = vcmp.gt.s32.totalorder %v278, 0
        %282 = vrot.lane.b32.xlu0 %v264, 9
        %v283 = vpop.permute.xlu0 %282
        %vm284 = vcmask 72704
        %v287 = vsel %vm284, 0, %v283
        %v289 = vsel %vm280, 1, 0
        %vm290 = vcmp.eq.s32.totalorder %v289, 1
        %vm291 = vmpackc.low %vm290, %vm290
        %v292 = vsel %vm291, %v287, 0
        %vm293 = vcmask 519168
        %294 = vst.msk [vmem:[#allocation2] sm:$0xf] %vm293, %v292
        %296 = vrot.lane.b32.xlu0 %v263, 8
        %v297 = vpop.permute.xlu0 %296
        %vm298 = vcmask 64512
        %v300 = vsel %vm298, 0, %v297
        %v302 = vrot.slane %v300, 4
        %vm304 = vcmask 523268
        %305 = vst.msk [vmem:[#allocation2] sm:$0xf0] %vm304, %v302
        %306 = vrot.lane.b32.xlu0 %v264, 8
        %v307 = vpop.permute.xlu0 %306
        %v309 = vsel %vm298, 0, %v307
        %311 = vst.msk [vmem:[#allocation2 + $0x8] sm:$0xf] %vm293, %v309
        %312 = vrot.lane.b32.xlu0 %v263, 7
        %v313 = vpop.permute.xlu0 %312
        %vm314 = vcmask 56320
        %v316 = vsel %vm314, 0, %v313
        %v318 = vsel %vm279, 1, 0
        %vm319 = vcmp.eq.s32.totalorder %v318, 1
        %vm320 = vmpackc.low %vm319, %vm319
        %v321 = vsel %vm320, %v316, 0
        %v323 = vrot.slane %v321, 4
        %325 = vst.msk [vmem:[#allocation2 + $0x8] sm:$0xf0] %vm304, %v323
        %327 = vrot.lane.b32.xlu0 %v262, 1
        %v328 = vpop.permute.xlu0 %327
        %vm329 = vcmask 7168
        %v331 = vsel %vm329, 0, %v328
        %v333 = vsel %vm291, %v331, 0
        %334 = vst.msk [vmem:[#allocation2 + $0x10] sm:$0xf] %vm293, %v333
        %v336 = vrot.slane %v261, 4
        %338 = vst.msk [vmem:[#allocation2 + $0x10] sm:$0xf0] %vm304, %v336
        %339 = vst.msk [vmem:[#allocation2 + $0x18] sm:$0xf] %vm293, %v262
        %340 = vrot.lane.b32.xlu0 %v261, 127
        %v341 = vpop.permute.xlu0 %340
        %vm342 = vcmask 515072
        %v344 = vsel %vm342, %v341, 0
        %v346 = vsel %vm320, %v344, 0
        %v348 = vrot.slane %v346, 4
        %350 = vst.msk [vmem:[#allocation2 + $0x18] sm:$0xf0] %vm304, %v348
        %351 = vrot.lane.b32.xlu0 %v264, 1
        %v352 = vpop.permute.xlu0 %351
        %v354 = vsel %vm329, 0, %v352
        %v356 = vsel %vm291, %v354, 0
        %357 = vst.msk [vmem:[#allocation2 + $0x20] sm:$0xf] %vm293, %v356
        %v358 = vrot.slane %v263, 4
        %360 = vst.msk [vmem:[#allocation2 + $0x20] sm:$0xf0] %vm304, %v358
        %361 = vst.msk [vmem:[#allocation2 + $0x28] sm:$0xf] %vm293, %v264
        %362 = vrot.lane.b32.xlu0 %v263, 127
        %v363 = vpop.permute.xlu0 %362
        %v365 = vsel %vm342, %v363, 0
        %v367 = vsel %vm320, %v365, 0
        %v369 = vrot.slane %v367, 4
        %371 = vst.msk [vmem:[#allocation2 + $0x28] sm:$0xf0] %vm304, %v369
        %372 = vrot.lane.b32.xlu0 %v262, 121
        %v373 = vpop.permute.xlu0 %372
        %vm374 = vcmask 465920
        %v376 = vsel %vm374, %v373, 0
        %v378 = vsel %vm291, %v376, 0
        %379 = vst.msk [vmem:[#allocation2 + $0x30] sm:$0xf] %vm293, %v378
        %380 = vrot.lane.b32.xlu0 %v261, 120
        %v381 = vpop.permute.xlu0 %380
        %vm382 = vcmask 457728
        %v384 = vsel %vm382, %v381, 0
        %v386 = vrot.slane %v384, 4
        %388 = vst.msk [vmem:[#allocation2 + $0x30] sm:$0xf0] %vm304, %v386
        %389 = vrot.lane.b32.xlu0 %v262, 120
        %v390 = vpop.permute.xlu0 %389
        %v392 = vsel %vm382, %v390, 0
        %394 = vst.msk [vmem:[#allocation2 + $0x38] sm:$0xf] %vm293, %v392
        %395 = vrot.lane.b32.xlu0 %v261, 119
        %v396 = vpop.permute.xlu0 %395
        %vm397 = vcmask 449536
        %v399 = vsel %vm397, %v396, 0
        %v401 = vsel %vm320, %v399, 0
        %v403 = vrot.slane %v401, 4
        %405 = vst.msk [vmem:[#allocation2 + $0x38] sm:$0xf0] %vm304, %v403
        %v406 = vld [vmem:[#allocation3] sm:$0xff]
        %v407 = vld [vmem:[#allocation7] sm:$0xf]
        %v408 = vld [vmem:[#allocation2] sm:$0xff]
        %v409 = vld [vmem:[#allocation2 + $0x8] sm:$0xff]
        %v410 = vld [vmem:[#allocation2 + $0x10] sm:$0xff]
        %v411 = vld [vmem:[#allocation2 + $0x18] sm:$0xff]
        %v412 = vld [vmem:[#allocation2 + $0x20] sm:$0xff]
        %v413 = vld [vmem:[#allocation2 + $0x28] sm:$0xff]
        %v414 = vld [vmem:[#allocation2 + $0x30] sm:$0xff]
        %v415 = vld [vmem:[#allocation2 + $0x38] sm:$0xff]
        %416 = vmatprep.subr.bf16.mxu0 0
        %417 = vmatpush1.bf16.msra.mxu0 %v408
        %418 = vmatprep.subr.bf16.mxu0 0
        %419 = vmatpush1.bf16.msra.mxu0 %v409
        %420 = vmatprep.subr.bf16.mxu0 0
        %421 = vmatpush1.bf16.msra.mxu0 %v410
        %422 = vmatprep.subr.bf16.mxu0 0
        %423 = vmatpush1.bf16.msra.mxu0 %v411
        %424 = vmatprep.subr.bf16.mxu0 0
        %425 = vmatpush1.bf16.msra.mxu0 %v412
        %426 = vmatprep.subr.bf16.mxu0 0
        %427 = vmatpush1.bf16.msra.mxu0 %v413
        %428 = vmatprep.subr.bf16.mxu0 0
        %429 = vmatpush1.bf16.msra.mxu0 %v414
        %430 = vmatprep.subr.bf16.mxu0 0
        %431 = vmatpush1.bf16.msra.mxu0 %v415
        %432 = vmatprep.subr.bf16.mxu0 0
        %433 = vmatpush1.bf16.msra.mxu0 0
        %434 = vmatprep.subr.bf16.mxu0 0
        %435 = vmatpush1.bf16.msra.mxu0 0
        %436 = vmatprep.subr.bf16.mxu0 0
        %437 = vmatpush1.bf16.msra.mxu0 0
        %438 = vmatprep.subr.bf16.mxu0 0
        %439 = vmatpush1.bf16.msra.mxu0 0
        %440 = vmatprep.subr.bf16.mxu0 0
        %441 = vmatpush1.bf16.msra.mxu0 0
        %442 = vmatprep.subr.bf16.mxu0 0
        %443 = vmatpush1.bf16.msra.mxu0 0
        %444 = vmatprep.subr.bf16.mxu0 0
        %445 = vmatpush1.bf16.msra.mxu0 0
        %446 = vmatprep.subr.bf16.mxu0 0
        %447 = vmatpush1.bf16.msra.mxu0 0
        %448 = vmatprep.mubr.bf16.mxu0 0
        %449 = vmatmul.mubr.bf16.gmra.mrb[0].mxu0 %v407
        %v450 = vpop.f32.mrb[0].mxu0
        %v451 = vadd.f32 0.0, %v450
        %v452 = vpop.f32.mrb[0].mxu0
        %v453 = vpop.f32.mrb[0].mxu0
        %v454 = vpop.f32.mrb[0].mxu0
        %455 = vdwg.mxu0
        %v456 = vadd.f32 %v406, %v451
        %457 = vst.msk [vmem:[#allocation3] sm:$0xff] %vm208, %v456
        // Predicated region
        $region41: #{tpu_custom_call.1} parent=27 // pred_check
          %p458 = pneg %p198
        $region42: #{tpu_custom_call.1} parent=27 // pred_check_branch
          %460 = sbr.rel (%p458) target = $region44
        $region43: #{tpu_custom_call.1} parent=27 // pred_region
          %v461 = vld [vmem:[#allocation3] sm:$0xff]
          %462 = vst.msk [vmem:[%s196] sm:$0xff] %vm208, %v461
        $region44: #{tpu_custom_call.1} parent=27 // pred_fallthru
          _
        %s463 = sand.u32 %s94, 1
        %s464 = scalar_lea.sflag [#allocation6], %s463
        %s465 = sand.u32 %s94, 1
        %s466 = smul.addr %s465, 8
        %s467 = scalar_lea.vmem [#allocation9], %s466
        // Predicated region
        $region45: #{tpu_custom_call.1} parent=27 // pred_check
          %p468 = pneg %p104
        $region46: #{tpu_custom_call.1} parent=27 // pred_check_branch
          %470 = sbr.rel (%p468) target = $region48
        $region47: #{tpu_custom_call.1} parent=27 // pred_region
          %s472 = ssub.s32 128, 128
          %473 = vsyncadd %s464, %s472
          %s474 = smul.addr %s24, 128
          %s475 = scalar_lea.hbm %s2, %s474
          %s477 = sshll.u32 %s467, 4
          %s478 = int_to_ptr.vmem [resolvable:$true] %s477
          %480 = dma.vmem_to_hbm [thread:$0]  %s478, 128, %s475, %s464
        $region48: #{tpu_custom_call.1} parent=27 // pred_fallthru
          _
      $region28: #{tpu_custom_call.1} parent=5 // pred_fallthru
        _
      %p481 = scmp.le.s32.totalorder 2, %s15
      // Predicated region
      $region49: #{tpu_custom_call.1} parent=5 // pred_check
        %p482 = pneg %p481
      $region50: #{tpu_custom_call.1} parent=5 // pred_check_branch
        %484 = sbr.rel (%p482) target = $region52
      $region51: #{tpu_custom_call.1} parent=5 // pred_region
        %s485 = ssub.s32 %s15, 2
        // Predicated region
        $region53: #{tpu_custom_call.1} parent=51 // pred_check
          %p486 = pneg %p110
        $region54: #{tpu_custom_call.1} parent=51 // pred_check_branch
          %488 = sbr.rel (%p486) target = $region56
        $region55: #{tpu_custom_call.1} parent=51 // pred_region
          %s489 = sand.u32 %s95, 1
          %s490 = scalar_lea.sflag [#allocation6], %s489
          %s491 = sand.u32 %s95, 1
          %s492 = smul.addr %s491, 8
          %s493 = scalar_lea.vmem [#allocation9], %s492
          %494 = dma.done %s490, 128
        $region56: #{tpu_custom_call.1} parent=51 // pred_fallthru
          _
      $region52: #{tpu_custom_call.1} parent=5 // pred_fallthru
        _
    $region6: #{tpu_custom_call.1} parent=1 // loop_footer
      %s19 = sadd.s32 1, %s15
    $region7: #{tpu_custom_call.1} parent=1 // loop_footer_branch
      %14 = sbr.rel target = $region3
    $region8: #{tpu_custom_call.1} parent=1 // loop_exit
      _
    %495 = vsyncpa [#allocation5], 1
    %s496 = scalar_lea.sflag [#allocation5], 1
    %497 = vsyncpa %s496, 1
    %498 = vsyncpa [#allocation8], 1
    %499 = vsyncpa [#allocation6], 1
    %s500 = scalar_lea.sflag [#allocation6], 1
    %501 = vsyncpa %s500, 1

</llo_original>
